<compile_context>
chip_gen: v6e
topology: v6e:2x2x1
jax: 0.10.0
libtpu: 0.0.40
codegen_flags: <defaults>
</compile_context>

<pallas_src>
import functools

import jax
import jax.numpy as jnp
from jax.experimental import pallas as pl
from jax.experimental.pallas import tpu as pltpu


def _round_up(x, m):
    return ((x + m - 1) // m) * m


def _supports_bf16_eup():
    """bf16 VPU/EUP exists on v6e/v7x; keep f32 elementwise math on v5e/older."""
    try:
        kind = jax.devices()[0].device_kind.lower()
    except Exception:
        return False
    return ("v6" in kind) or ("v7" in kind)


# --------------------------------------------------------------------------
# Kernel A: fused projection (heads + folded attention-logit columns).
# --------------------------------------------------------------------------
def _proj_kernel(h_ref, w_ref, feat_ref):
    feat_ref[...] = jnp.dot(h_ref[...], w_ref[...],
                            preferred_element_type=jnp.float32
                            ).astype(feat_ref.dtype)


# --------------------------------------------------------------------------
# Kernel B: masked edge-softmax + aggregation with online softmax.
# Grid = (dst_tiles ["parallel"], src_tiles ["arbitrary", last]).
# counts_ref is a scalar-prefetch [n_dst_tiles, n_src_tiles] edge-count table.
# --------------------------------------------------------------------------
def _attn_kernel(counts_ref, adj_ref, feat_ref, elt_ref, er_ref, b_ref, o_ref,
                 m_sc, l_sc, acc_sc, *,
                 n_heads, out_dim, hd, negative_slope, apply_relu, bf16_exp):
    i = pl.program_id(0)
    j = pl.program_id(1)
    nj = pl.num_programs(1)
    tdst = adj_ref.shape[0]
    hd_pad = o_ref.shape[-1]

    @pl.when(j == 0)
    def _():
        m_sc[...] = jnp.full_like(m_sc, -1e30)
        l_sc[...] = jnp.zeros_like(l_sc)
        acc_sc[...] = jnp.zeros_like(acc_sc)

    # Skip tile pairs with no edges (sparse graphs): compute is gated, the
    # running softmax state is simply carried through.
    @pl.when(counts_ref[i, j] > 0)
    def _():
        has_edge = adj_ref[...] > 0                  # [tdst, tsrc] (int8 mask)
        elt = elt_ref[...]                           # [H, tsrc]   f32
        er = er_ref[...]                             # [tdst, H]   f32
        feat = feat_ref[...]                         # [tsrc, hd_p] bf16

        for h in range(n_heads):                     # H is 1-2: static unroll
            e = er[:, h:h + 1] + elt[h:h + 1, :]                   # [tdst, tsrc]
            e = jnp.where(e > 0, e, negative_slope * e)            # LeakyReLU(0.2)
            e = jnp.where(has_edge, e, jnp.float32(-1e30))

            m_prev = m_sc[h]                                       # [tdst, 1]
            m_new = jnp.maximum(m_prev, jnp.max(e, axis=-1, keepdims=True))
            x = e - m_new
            if bf16_exp:
                # v6e/v7x: bf16 EUP/VPU at ~2x throughput; keep the mask-select
                # (fully-masked rows must stay exactly 0) and keep the running
                # max/denominator math in f32.
                p16 = jnp.exp(x.astype(jnp.bfloat16))
                p16 = jnp.where(has_edge, p16, jnp.zeros_like(p16))
                p32 = p16.astype(jnp.float32)
                p_mm = p16
            else:
                p32 = jnp.where(has_edge, jnp.exp(x), 0.0)
                p_mm = p32.astype(feat.dtype)
            corr = jnp.exp(m_prev - m_new)                         # [tdst, 1] f32

            m_sc[h] = m_new
            l_sc[h] = corr * l_sc[h] + jnp.sum(p32, axis=-1, keepdims=True)

            # Full-width (N = hd_p = 128) PV matmul; MXU cost is the same as a
            # 32-lane RHS, but the accumulator update stays vreg-aligned.
            pv = jnp.dot(p_mm, feat, preferred_element_type=jnp.float32)
            acc_sc[h] = corr * acc_sc[h] + pv

    @pl.when(j == nj - 1)
    def _():
        for h in range(n_heads):
            sl = slice(h * out_dim, (h + 1) * out_dim)
            # Zero in-degree rows (and padded dst rows) have l == 0 -> acc == 0,
            # so the guarded reciprocal still yields exactly 0 (then + bias).
            inv = pl.reciprocal(jnp.maximum(l_sc[h], 1e-30), approx=True)
            val = acc_sc[h][:, sl] * inv + b_ref[:, sl]
            if apply_relu:
                val = jnp.maximum(val, 0.0)
            o_ref[:, sl] = val.astype(o_ref.dtype)
        if hd_pad > hd:
            o_ref[:, hd:] = jnp.zeros((tdst, hd_pad - hd), o_ref.dtype)


# --------------------------------------------------------------------------
# One GATConv layer (all heads fused).
# --------------------------------------------------------------------------
def gat_conv_layer(h, adj, prep, *, apply_relu, bf16_exp):
    """h: [n_src, in_dim] f32.  adj: [n_dst, n_src] int8 (1 = edge src->dst).
    Returns [n_dst, n_heads*out_dim] f32 (head-major == torch .flatten(1))."""
    n_dst, n_src = adj.shape
    in_dim = h.shape[1]
    n_heads = prep["n_heads"]
    out_dim = prep["out_dim"]
    hd = n_heads * out_dim
    hd_p = prep["W"].shape[1]

    # ---- tiling ----
    # Kernel B src tiles (lane-aligned x128) and dst tiles (x32 so the int8
    # adjacency uses its native (32,128) tiling).  Bigger dst tiles halve the
    # feat/elt re-stream over HBM.
    tsrc = min(1024, _round_up(n_src, 128))
    n_src_tiles = pl.cdiv(n_src, tsrc)
    n_src_p = n_src_tiles * tsrc

    # Kernel A can use a larger src tile (its per-step VMEM is tiny with W
    # resident); must evenly divide the shared src padding.
    tsrc_a = tsrc
    while tsrc_a * 2 <= 2048 and n_src_p % (tsrc_a * 2) == 0:
        tsrc_a *= 2
    n_src_tiles_a = n_src_p // tsrc_a
    if n_src_tiles_a > 1 and n_src_tiles_a % 2 == 1 and tsrc_a > tsrc:
        tsrc_a //= 2                               # v7x: even parallel tile count
        n_src_tiles_a = n_src_p // tsrc_a

    tdst = min(512, _round_up(n_dst, 32))
    n_dst_tiles = pl.cdiv(n_dst, tdst)
    if n_dst_tiles > 1 and n_dst_tiles % 2 == 1:
        n_dst_tiles += 1                           # v7x: 2 TCs want an even count
    n_dst_p = n_dst_tiles * tdst

    h_p = jnp.pad(h.astype(jnp.bfloat16), ((0, n_src_p - n_src), (0, 0)))
    adj_p = jnp.pad(adj, ((0, n_dst_p - n_dst), (0, n_src_p - n_src)))

    # ---- Kernel A: feat = h @ W_ext (heads fused, el/er folded in) ----
    feat = pl.pallas_call(
        _proj_kernel,
        out_shape=jax.ShapeDtypeStruct((n_src_p, hd_p), jnp.bfloat16),
        grid_spec=pltpu.PrefetchScalarGridSpec(
            num_scalar_prefetch=0,
            grid=(n_src_tiles_a,),
            in_specs=[
                pl.BlockSpec((tsrc_a, in_dim), lambda i: (i, 0)),   # h tile
                pl.BlockSpec((in_dim, hd_p), lambda i: (0, 0)),     # W_ext (resident)
            ],
            out_specs=pl.BlockSpec((tsrc_a, hd_p), lambda i: (i, 0)),
        ),
        compiler_params=pltpu.CompilerParams(
            dimension_semantics=("parallel",),
            vmem_limit_bytes=48 * 1024 * 1024),
    )(h_p, prep["W"])

    # Recover attention logits from the folded columns (tiny XLA ops).
    elt = feat[:, hd:hd + n_heads].astype(jnp.float32).T          # [H, n_src_p]
    er_full = feat[:, hd + n_heads:hd + 2 * n_heads].astype(jnp.float32)
    # dst nodes are the first n_dst rows of the src set (DGL block convention).
    if n_dst_p <= n_src_p:
        er_dst = er_full[:n_dst_p]
    else:
        er_dst = jnp.pad(er_full, ((0, n_dst_p - n_src_p), (0, 0)))

    # Per-(dst tile, src tile) "has any edge" table for empty-tile skipping.
    counts = (adj_p.reshape(n_dst_tiles, tdst, n_src_tiles, tsrc) != 0
              ).any(axis=(1, 3)).astype(jnp.int32)                 # [ndt, nst]

    # ---- Kernel B: masked edge-softmax + aggregation (online softmax) ----
    kernel = functools.partial(
        _attn_kernel, n_heads=n_heads, out_dim=out_dim, hd=hd,
        negative_slope=0.2, apply_relu=apply_relu, bf16_exp=bf16_exp)

    out_p = pl.pallas_call(
        kernel,
        out_shape=jax.ShapeDtypeStruct((n_dst_p, hd_p), jnp.float32),
        grid_spec=pltpu.PrefetchScalarGridSpec(
            num_scalar_prefetch=1,
            grid=(n_dst_tiles, n_src_tiles),
            in_specs=[
                pl.BlockSpec((tdst, tsrc), lambda i, j, c: (i, j)),     # adj (int8)
                pl.BlockSpec((tsrc, hd_p), lambda i, j, c: (j, 0)),     # feat (bf16)
                pl.BlockSpec((n_heads, tsrc), lambda i, j, c: (0, j)),  # el^T
                pl.BlockSpec((tdst, n_heads), lambda i, j, c: (i, 0)),  # er (dst rows)
                pl.BlockSpec((1, hd_p), lambda i, j, c: (0, 0)),        # bias
            ],
            out_specs=pl.BlockSpec((tdst, hd_p), lambda i, j, c: (i, 0)),
            scratch_shapes=[
                pltpu.VMEM((n_heads, tdst, 1), jnp.float32),      # running max
                pltpu.VMEM((n_heads, tdst, 1), jnp.float32),      # running denom
                pltpu.VMEM((n_heads, tdst, hd_p), jnp.float32),   # per-head acc
            ],
        ),
        compiler_params=pltpu.CompilerParams(
            dimension_semantics=("parallel", "arbitrary"),
            vmem_limit_bytes=48 * 1024 * 1024),   # fits v7x's 64 MiB physical VMEM
    )(counts, adj_p, feat, elt, er_dst, prep["bias"])

    return out_p[:n_dst, :hd]


# --------------------------------------------------------------------------
# Full GAT forward (matches the PyTorch module's forward).
# --------------------------------------------------------------------------
def gat_forward(prepared_params, blocks, x, *, bf16_exp=None):
    if bf16_exp is None:
        bf16_exp = _supports_bf16_eup()
    n_layers = len(prepared_params)
    h = x
    for i, (prep, adj) in enumerate(zip(prepared_params, blocks)):
        is_last = (i == n_layers - 1)
        out = gat_conv_layer(h, adj, prep, apply_relu=not is_last,
                             bf16_exp=bf16_exp)                  # [n_dst, H*out]
        if is_last:
            n_dst = adj.shape[0]
            out = out.reshape(n_dst, prep["n_heads"], prep["out_dim"]).mean(axis=1)
        h = out   # non-last layers: already head-major == torch .flatten(1)
    return h


# --------------------------------------------------------------------------
# Pure-JAX reference (f32) of the same forward, for a tolerance check.
# --------------------------------------------------------------------------
def gat_forward_reference(params, blocks, x):
    n_layers = len(params)
    h = x
    for i, (p, adj) in enumerate(zip(params, blocks)):
        heads, out_dim = p["n_heads"], p["out_dim"]
        n_src, n_dst = h.shape[0], adj.shape[0]
        feat = (h @ p["W"]).reshape(n_src, heads, out_dim)
        el = jnp.einsum("sho,ho->sh", feat, p["attn_l"])
        er = jnp.einsum("sho,ho->sh", feat[:n_dst], p["attn_r"])
        e = er[:, None, :] + el[None, :, :]                       # [dst, src, h]
        e = jnp.where(e > 0, e, 0.2 * e)
        mask = (adj > 0)[:, :, None]
        e = jnp.where(mask, e, -jnp.inf)
        m = jnp.max(e, axis=1, keepdims=True)
        m = jnp.where(jnp.isfinite(m), m, 0.0)
        pexp = jnp.where(mask, jnp.exp(e - m), 0.0)
        alpha = pexp / jnp.maximum(pexp.sum(axis=1, keepdims=True), 1e-30)
        rst = jnp.einsum("dsh,sho->dho", alpha, feat)
        out = rst.reshape(n_dst, heads * out_dim) + p["bias"]
        if i == n_layers - 1:
            out = out.reshape(n_dst, heads, out_dim).mean(axis=1)
        else:
            out = jnp.maximum(out, 0.0)
        h = out
    return h


# --------------------------------------------------------------------------
# Parameter init (natural GATConv layout) + one-time kernel-friendly re-layout.
# --------------------------------------------------------------------------
def init_gat_params(key, in_feats, n_hidden, n_classes, n_layers, n_heads):
    params = []
    for i in range(n_layers):
        in_dim = in_feats if i == 0 else n_hidden * n_heads[i - 1]
        out_dim = n_classes if i == n_layers - 1 else n_hidden
        heads = n_heads[i]
        key, k1, k2, k3 = jax.random.split(key, 4)
        params.append({
            "W": 0.1 * jax.random.normal(k1, (in_dim, heads * out_dim), jnp.float32),
            "attn_l": 0.1 * jax.random.normal(k2, (heads, out_dim), jnp.float32),
            "attn_r": 0.1 * jax.random.normal(k3, (heads, out_dim), jnp.float32),
            "bias": jnp.zeros((heads * out_dim,), jnp.float32),
            "n_heads": heads,
            "out_dim": out_dim,
        })
    return params


def prepare_gat_params(params):
    """One-time re-layout / padding.  W_ext's padded lanes carry the folded
    attention-logit columns: col hd+h = W_h @ attn_l[h], col hd+H+h = W_h @ attn_r[h]."""
    prepped = []
    for p in params:
        heads, out_dim = p["n_heads"], p["out_dim"]
        in_dim, hd = p["W"].shape
        hd_p = _round_up(hd + 2 * heads, 128)
        W_ext = jnp.zeros((in_dim, hd_p), jnp.float32).at[:, :hd].set(p["W"])
        for h in range(heads):
            w_h = p["W"][:, h * out_dim:(h + 1) * out_dim]        # [in_dim, out_dim]
            W_ext = W_ext.at[:, hd + h].set(w_h @ p["attn_l"][h])
            W_ext = W_ext.at[:, hd + heads + h].set(w_h @ p["attn_r"][h])
        bias = jnp.zeros((1, hd_p), jnp.float32).at[0, :hd].set(p["bias"])
        prepped.append({"W": W_ext.astype(jnp.bfloat16), "bias": bias,
                        "n_heads": heads, "out_dim": out_dim})
    return prepped


if __name__ == "__main__":
    # Small config consistent with the module: n_layers=2, n_heads=[2, 1].
    in_feats, n_hidden, n_classes = 16, 32, 8
    n_layers, n_heads = 2, [2, 1]

    key = jax.random.PRNGKey(0)
    key, kx, ka0, ka1 = jax.random.split(key, 4)

    # Block 0: 16 src -> 8 dst;  Block 1: 8 src -> 8 dst (dst of block 0).
    n_src0, n_dst0 = 16, 8
    n_src1, n_dst1 = 8, 8
    x = jax.random.normal(kx, (n_src0, in_feats), jnp.float32)

    # Dense adjacency masks (dst x src), int8.
    adj0 = jax.random.bernoulli(ka0, 0.4, (n_dst0, n_src0)).astype(jnp.int8)
    adj1 = jax.random.bernoulli(ka1, 0.4, (n_dst1, n_src1)).astype(jnp.int8)
    blocks = [adj0, adj1]

    params = init_gat_params(key, in_feats, n_hidden, n_classes, n_layers, n_heads)
    prepped = prepare_gat_params(params)

    out = gat_forward(prepped, blocks, x)
    out = jax.block_until_ready(out)
    assert out.shape == (n_dst1, n_classes), out.shape
    assert bool(jnp.all(jnp.isfinite(out)))

    # Loose tolerance: weights/features/p are bf16 and the softmax denominator
    # uses an approximate reciprocal (expected flash-style deviation ~1e-2).
    ref = gat_forward_reference(params, blocks, x)
    assert bool(jnp.allclose(out, ref, atol=7e-2, rtol=7e-2)), (
        float(jnp.max(jnp.abs(out - ref))))
    print("KERNEL_OK")
</pallas_src>

<mosaic_0001>
module attributes {stable_mosaic.version = 11 : i64} {
  func.func @_proj_kernel(%arg0: i32, %arg1: memref<128x16xbf16, #tpu.memory_space<vmem>>, %arg2: memref<16x128xbf16, #tpu.memory_space<vmem>>, %arg3: memref<128x128xbf16, #tpu.memory_space<vmem>>) attributes {dimension_semantics = [#tpu.dimension_semantics<parallel>], iteration_bounds = array<i64: 1>, scalar_prefetch = 0 : i64, scratch_operands = 0 : i64, tpu.core_type = #tpu.core_type<tc>, window_params = [{transform_indices = @transform_0, window_bounds = array<i64: 128, 16>}, {pipeline_mode = #tpu.pipeline_mode<synchronous>, transform_indices = @transform_1, window_bounds = array<i64: 16, 128>}, {transform_indices = @transform_2, window_bounds = array<i64: 128, 128>}]} {
    %c0 = arith.constant 0 : index
    %c0_0 = arith.constant 0 : index
    %0 = vector.load %arg1[%c0, %c0_0] : memref<128x16xbf16, #tpu.memory_space<vmem>>, vector<128x16xbf16>
    %c0_1 = arith.constant 0 : index
    %c0_2 = arith.constant 0 : index
    %1 = vector.load %arg2[%c0_1, %c0_2] : memref<16x128xbf16, #tpu.memory_space<vmem>>, vector<16x128xbf16>
    %cst = arith.constant dense<0.000000e+00> : vector<128x128xf32>
    %2 = tpu.matmul %0, %1, %cst {dimension_numbers = #tpu.dot_dimension_numbers<[1], [0], [0], [1], [0, 0, 1, 1], [], []>} : vector<128x16xbf16>, vector<16x128xbf16>, vector<128x128xf32> -> vector<128x128xf32>
    %3 = arith.truncf %2 : vector<128x128xf32> to vector<128x128xbf16>
    %c0_3 = arith.constant 0 : index
    %c0_4 = arith.constant 0 : index
    %4 = vector.load %arg3[%c0_3, %c0_4] : memref<128x128xbf16, #tpu.memory_space<vmem>>, vector<128x128xbf16>
    tpu.vector_store %arg3[%c0_3, %c0_4], %3 {strides = array<i32>} : memref<128x128xbf16, #tpu.memory_space<vmem>>, vector<128x128xbf16>,
    return
  }
  func.func @transform_0(%arg0: i32) -> (i32, i32) {
    %c0_i32 = arith.constant 0 : i32
    %c0_i32_0 = arith.constant 0 : i32
    return %arg0, %c0_i32 : i32, i32
  }
  func.func @transform_1(%arg0: i32) -> (i32, i32) {
    %c0_i32 = arith.constant 0 : i32
    %c0_i32_0 = arith.constant 0 : i32
    %c0_i32_1 = arith.constant 0 : i32
    return %c0_i32, %c0_i32_0 : i32, i32
  }
  func.func @transform_2(%arg0: i32) -> (i32, i32) {
    %c0_i32 = arith.constant 0 : i32
    %c0_i32_0 = arith.constant 0 : i32
    return %arg0, %c0_i32 : i32, i32
  }
}

</mosaic_0001>

<llo_original>
// kernel: tpu_custom_call.1
$region0: #{tpu_custom_call.1}
  #allocation0 [shape = 'u32[]', space=smem, size = 0x4, offset = 0x4, fixed_abs, tag = 'smem constant byte address 0x4 - core index']
  #allocation1 [shape = 'u32[144,128]{1,0:T(1,128)}', space=vmem, size = 0x12000, scoped, tag = 'internal scratch']
  %s0 = inlined_call_operand.vmem [shape: bf16[128,16], index: 0, kind: input, shape index: {}]
  %s1 = inlined_call_operand.vmem [shape: bf16[16,128], index: 1, kind: input, shape index: {}]
  %s2 = inlined_call_operand.hbm [shape: bf16[128,128], index: 2, kind: output, shape index: {}]
  %s3 = sld [smem:[#allocation0]]
  $region18: #{tpu_custom_call.1} parent=0
    _
  %s5 = ssub.s32 1, %s3
  %s6 = scalar_select 0, %s5, %s3
  $region1: #{tpu_custom_call.1} parent=0
    #allocation2 [shape = 'u8[32768]{0}', space=vmem, size = 0x8000, scoped, tag = 'output window, operand 0, single buffered']
    #allocation3 [shape = 's32[1]{0}', space=sflag, size = 0x4, scoped, tag = 'scoped memory for tpu_custom_call.1']
    %7 = vsyncpa [#allocation3], 0
    // Predicated region
    $region2: #{tpu_custom_call.1} parent=1 // pred_check
      _
    $region3: #{tpu_custom_call.1} parent=1 // pred_check_branch
      %9 = sbr.rel (0) target = $region5
    $region4: #{tpu_custom_call.1} parent=1 // pred_region
      _
    $region5: #{tpu_custom_call.1} parent=1 // pred_fallthru
      _
    // Predicated region
    $region6: #{tpu_custom_call.1} parent=1 // pred_check
      _
    $region7: #{tpu_custom_call.1} parent=1 // pred_check_branch
      %11 = sbr.rel (0) target = $region9
    $region8: #{tpu_custom_call.1} parent=1 // pred_region
      _
    $region9: #{tpu_custom_call.1} parent=1 // pred_fallthru
      _
    %v13 = vld [vmem:[%s0] sm:$0xf]
    %v14 = vld [vmem:[%s0 + $0x4] sm:$0xf]
    %v15 = vld [vmem:[%s0 + $0x8] sm:$0xf]
    %v16 = vld [vmem:[%s0 + $0xc] sm:$0xf]
    %v17 = vld [vmem:[%s0 + $0x10] sm:$0xf]
    %v18 = vld [vmem:[%s0 + $0x14] sm:$0xf]
    %v19 = vld [vmem:[%s0 + $0x18] sm:$0xf]
    %v20 = vld [vmem:[%s0 + $0x1c] sm:$0xf]
    %v21 = vld [vmem:[%s0 + $0x20] sm:$0xf]
    %v22 = vld [vmem:[%s0 + $0x24] sm:$0xf]
    %v23 = vld [vmem:[%s0 + $0x28] sm:$0xf]
    %v24 = vld [vmem:[%s0 + $0x2c] sm:$0xf]
    %v25 = vld [vmem:[%s0 + $0x30] sm:$0xf]
    %v26 = vld [vmem:[%s0 + $0x34] sm:$0xf]
    %v27 = vld [vmem:[%s0 + $0x38] sm:$0xf]
    %v28 = vld [vmem:[%s0 + $0x3c] sm:$0xf]
    %v29 = vld [vmem:[%s1] sm:$0xf]
    %v30 = vld [vmem:[%s1 + $0x4] sm:$0xf]
    %v47 = vunpack.c.l.b16 %v13
    %v48 = vunpack.c.l.b16 %v14
    %v49 = vunpack.c.l.b16 %v15
    %v50 = vunpack.c.l.b16 %v16
    %v51 = vunpack.c.l.b16 %v17
    %v52 = vunpack.c.l.b16 %v18
    %v53 = vunpack.c.l.b16 %v19
    %v54 = vunpack.c.l.b16 %v20
    %v55 = vunpack.c.l.b16 %v21
    %v56 = vunpack.c.l.b16 %v22
    %v57 = vunpack.c.l.b16 %v23
    %v58 = vunpack.c.l.b16 %v24
    %v59 = vunpack.c.l.b16 %v25
    %v60 = vunpack.c.l.b16 %v26
    %v61 = vunpack.c.l.b16 %v27
    %v62 = vunpack.c.l.b16 %v28
    %v63 = vpack.c.b16 %v48, %v47
    %v64 = vpack.c.b16 %v50, %v49
    %v65 = vpack.c.b16 %v52, %v51
    %v66 = vpack.c.b16 %v54, %v53
    %v67 = vpack.c.b16 %v56, %v55
    %v68 = vpack.c.b16 %v58, %v57
    %v69 = vpack.c.b16 %v60, %v59
    %v70 = vpack.c.b16 %v62, %v61
    %v73 = vunpack.c.l.b16 %v29
    %v74 = vunpack.c.l.b16 %v30
    %v75 = vpack.c.b16 %v74, %v73
    %vm77 = vcmask 130048
    %v79 = vsel %vm77, %v63, 0
    %v82 = vsel %vm77, %v64, 0
    %v85 = vsel %vm77, %v65, 0
    %v88 = vsel %vm77, %v66, 0
    %v91 = vsel %vm77, %v67, 0
    %v94 = vsel %vm77, %v68, 0
    %v97 = vsel %vm77, %v69, 0
    %v100 = vsel %vm77, %v70, 0
    %102 = vmatprep.subr.bf16.mxu0 0
    %103 = vmatpush1.bf16.msra.mxu0 0
    %104 = vmatprep.subr.bf16.mxu0 0
    %105 = vmatpush1.bf16.msra.mxu0 0
    %106 = vmatprep.subr.bf16.mxu0 0
    %107 = vmatpush1.bf16.msra.mxu0 0
    %108 = vmatprep.subr.bf16.mxu0 0
    %109 = vmatpush1.bf16.msra.mxu0 0
    %110 = vmatprep.subr.bf16.mxu0 0
    %111 = vmatpush1.bf16.msra.mxu0 0
    %112 = vmatprep.subr.bf16.mxu0 0
    %113 = vmatpush1.bf16.msra.mxu0 0
    %114 = vmatprep.subr.bf16.mxu0 0
    %115 = vmatpush1.bf16.msra.mxu0 0
    %116 = vmatprep.subr.bf16.mxu0 0
    %117 = vmatpush1.bf16.msra.mxu0 %v75
    %118 = vmatprep.subr.bf16.mxu0 0
    %119 = vmatpush2.bf16.msra.mxu0 0
    %120 = vmatprep.subr.bf16.mxu0 0
    %121 = vmatpush2.bf16.msra.mxu0 0
    %122 = vmatprep.subr.bf16.mxu0 0
    %123 = vmatpush2.bf16.msra.mxu0 0
    %124 = vmatprep.subr.bf16.mxu0 0
    %125 = vmatpush2.bf16.msra.mxu0 0
    %126 = vmatprep.subr.bf16.mxu0 0
    %127 = vmatpush2.bf16.msra.mxu0 0
    %128 = vmatprep.subr.bf16.mxu0 0
    %129 = vmatpush2.bf16.msra.mxu0 0
    %130 = vmatprep.subr.bf16.mxu0 0
    %131 = vmatpush2.bf16.msra.mxu0 0
    %132 = vmatprep.subr.bf16.mxu0 0
    %133 = vmatpush2.bf16.msra.mxu0 0
    %134 = vmatprep.mubr.bf16.mxu0 0
    %135 = vmatmul.mubr.bf16.gmra.mxu0 %v79
    %v136 = vpop.f32.mrf.mxu0
    %v137 = vadd.f32 0.0, %v136
    %v138 = vpop.f32.mrf.mxu0
    %v139 = vpop.f32.mrf.mxu0
    %v140 = vadd.f32 0.0, %v139
    %v141 = vpop.f32.mrf.mxu0
    %142 = vmatprep.mubr.bf16.mxu0 0
    %143 = vmatmul.mubr.bf16.gmra.mxu0 %v82
    %v144 = vpop.f32.mrf.mxu0
    %v145 = vadd.f32 0.0, %v144
    %v146 = vpop.f32.mrf.mxu0
    %v147 = vpop.f32.mrf.mxu0
    %v148 = vadd.f32 0.0, %v147
    %v149 = vpop.f32.mrf.mxu0
    %150 = vmatprep.mubr.bf16.mxu0 0
    %151 = vmatmul.mubr.bf16.gmra.mxu0 %v85
    %v152 = vpop.f32.mrf.mxu0
    %v153 = vadd.f32 0.0, %v152
    %v154 = vpop.f32.mrf.mxu0
    %v155 = vpop.f32.mrf.mxu0
    %v156 = vadd.f32 0.0, %v155
    %v157 = vpop.f32.mrf.mxu0
    %158 = vmatprep.mubr.bf16.mxu0 0
    %159 = vmatmul.mubr.bf16.gmra.mxu0 %v88
    %v160 = vpop.f32.mrf.mxu0
    %v161 = vadd.f32 0.0, %v160
    %v162 = vpop.f32.mrf.mxu0
    %v163 = vpop.f32.mrf.mxu0
    %v164 = vadd.f32 0.0, %v163
    %v165 = vpop.f32.mrf.mxu0
    %166 = vmatprep.mubr.bf16.mxu0 0
    %167 = vmatmul.mubr.bf16.gmra.mxu0 %v91
    %v168 = vpop.f32.mrf.mxu0
    %v169 = vadd.f32 0.0, %v168
    %v170 = vpop.f32.mrf.mxu0
    %v171 = vpop.f32.mrf.mxu0
    %v172 = vadd.f32 0.0, %v171
    %v173 = vpop.f32.mrf.mxu0
    %174 = vmatprep.mubr.bf16.mxu0 0
    %175 = vmatmul.mubr.bf16.gmra.mxu0 %v94
    %v176 = vpop.f32.mrf.mxu0
    %v177 = vadd.f32 0.0, %v176
    %v178 = vpop.f32.mrf.mxu0
    %v179 = vpop.f32.mrf.mxu0
    %v180 = vadd.f32 0.0, %v179
    %v181 = vpop.f32.mrf.mxu0
    %182 = vmatprep.mubr.bf16.mxu0 0
    %183 = vmatmul.mubr.bf16.gmra.mxu0 %v97
    %v184 = vpop.f32.mrf.mxu0
    %v185 = vadd.f32 0.0, %v184
    %v186 = vpop.f32.mrf.mxu0
    %v187 = vpop.f32.mrf.mxu0
    %v188 = vadd.f32 0.0, %v187
    %v189 = vpop.f32.mrf.mxu0
    %190 = vmatprep.mubr.bf16.mxu0 0
    %191 = vmatmul.mubr.bf16.gmra.mxu0 %v100
    %v192 = vpop.f32.mrf.mxu0
    %v193 = vadd.f32 0.0, %v192
    %v194 = vpop.f32.mrf.mxu0
    %v195 = vpop.f32.mrf.mxu0
    %v196 = vadd.f32 0.0, %v195
    %v197 = vpop.f32.mrf.mxu0
    %198 = vdwg.mxu0
    %v199 = vpack.c.bf16 %v140, %v137
    %v200 = vpack.c.bf16 %v148, %v145
    %v201 = vpack.c.bf16 %v156, %v153
    %v202 = vpack.c.bf16 %v164, %v161
    %v203 = vpack.c.bf16 %v172, %v169
    %v204 = vpack.c.bf16 %v180, %v177
    %v205 = vpack.c.bf16 %v188, %v185
    %v206 = vpack.c.bf16 %v196, %v193
    %v215 = vunpack.c.l.b16 %v199
    %v216 = vunpack.c.h.b16 %v199
    %v217 = vunpack.c.l.b16 %v200
    %v218 = vunpack.c.h.b16 %v200
    %v219 = vunpack.c.l.b16 %v201
    %v220 = vunpack.c.h.b16 %v201
    %v221 = vunpack.c.l.b16 %v202
    %v222 = vunpack.c.h.b16 %v202
    %v223 = vunpack.c.l.b16 %v203
    %v224 = vunpack.c.h.b16 %v203
    %v225 = vunpack.c.l.b16 %v204
    %v226 = vunpack.c.h.b16 %v204
    %v227 = vunpack.c.l.b16 %v205
    %v228 = vunpack.c.h.b16 %v205
    %v229 = vunpack.c.l.b16 %v206
    %v230 = vunpack.c.h.b16 %v206
    %v231 = vpack.c.b16 %v215, %v215
    %v232 = vpack.c.b16 %v216, %v216
    %v233 = vpack.c.b16 %v217, %v217
    %v234 = vpack.c.b16 %v218, %v218
    %v235 = vpack.c.b16 %v219, %v219
    %v236 = vpack.c.b16 %v220, %v220
    %v237 = vpack.c.b16 %v221, %v221
    %v238 = vpack.c.b16 %v222, %v222
    %v239 = vpack.c.b16 %v223, %v223
    %v240 = vpack.c.b16 %v224, %v224
    %v241 = vpack.c.b16 %v225, %v225
    %v242 = vpack.c.b16 %v226, %v226
    %v243 = vpack.c.b16 %v227, %v227
    %v244 = vpack.c.b16 %v228, %v228
    %v245 = vpack.c.b16 %v229, %v229
    %v246 = vpack.c.b16 %v230, %v230
    %263 = vst [vmem:[#allocation2] sm:$0xf] %v231
    %264 = vst [vmem:[#allocation2 + $0x4] sm:$0xf] %v232
    %265 = vst [vmem:[#allocation2 + $0x8] sm:$0xf] %v233
    %266 = vst [vmem:[#allocation2 + $0xc] sm:$0xf] %v234
    %267 = vst [vmem:[#allocation2 + $0x10] sm:$0xf] %v235
    %268 = vst [vmem:[#allocation2 + $0x14] sm:$0xf] %v236
    %269 = vst [vmem:[#allocation2 + $0x18] sm:$0xf] %v237
    %270 = vst [vmem:[#allocation2 + $0x1c] sm:$0xf] %v238
    %271 = vst [vmem:[#allocation2 + $0x20] sm:$0xf] %v239
    %272 = vst [vmem:[#allocation2 + $0x24] sm:$0xf] %v240
    %273 = vst [vmem:[#allocation2 + $0x28] sm:$0xf] %v241
    %274 = vst [vmem:[#allocation2 + $0x2c] sm:$0xf] %v242
    %275 = vst [vmem:[#allocation2 + $0x30] sm:$0xf] %v243
    %276 = vst [vmem:[#allocation2 + $0x34] sm:$0xf] %v244
    %277 = vst [vmem:[#allocation2 + $0x38] sm:$0xf] %v245
    %278 = vst [vmem:[#allocation2 + $0x3c] sm:$0xf] %v246
    // Predicated region
    $region10: #{tpu_custom_call.1} parent=1 // pred_check
      _
    $region11: #{tpu_custom_call.1} parent=1 // pred_check_branch
      %280 = sbr.rel (0) target = $region13
    $region12: #{tpu_custom_call.1} parent=1 // pred_region
      %s282 = ssub.s32 1024, 1024
      %283 = vsyncadd [#allocation3], %s282
      %s284 = sshll.u32 [#allocation2], 4
      %s285 = int_to_ptr.vmem [resolvable:$true] %s284
      %290 = dma.vmem_to_hbm [thread:$0]  %s285, 1024, %s2, [#allocation3], 64, 64, 4
    $region13: #{tpu_custom_call.1} parent=1 // pred_fallthru
      _
    // Predicated region
    $region14: #{tpu_custom_call.1} parent=1 // pred_check
      _
    $region15: #{tpu_custom_call.1} parent=1 // pred_check_branch
      %292 = sbr.rel (0) target = $region17
    $region16: #{tpu_custom_call.1} parent=1 // pred_region
      %293 = dma.done [#allocation3], 1024
    $region17: #{tpu_custom_call.1} parent=1 // pred_fallthru
      _
    %294 = vsyncpa [#allocation3], 1

</llo_original>
